<compile_context>
chip_gen: v7x
topology: tpu7x:2x2x1
jax: 0.10.0
libtpu: 0.0.40
codegen_flags: <defaults>
</compile_context>

<pallas_src>
import jax
import jax.numpy as jnp
import numpy as np
from jax.experimental import pallas as pl
from jax.experimental.pallas import tpu as pltpu

ENCODER_DIM = 512
OUT_C, OUT_H, OUT_W = 1, 16, 16
OUT_FEATURES = OUT_C * OUT_H * OUT_W          # 256 per head
FUSED_FEATURES = 2 * OUT_FEATURES             # 512 (velocity ++ seismic)
TM = 8                                        # batch rows per grid step (f32 sublane tile)


def _decoder_kernel(z_ref, w_ref, affine_ref, out_ref):
    """Fused int8-dequant GEMM for both decoder heads.

    z_ref      : (TM, 512) f32       latent tile
    w_ref      : (512, 512) int8     [w_vel | w_seis] (per-tensor symmetric)
    affine_ref : (2, 512) f32        row 0 = per-column scale, row 1 = bias
    out_ref    : (TM, 512) f32       [velocity | seismic] flattened
    """
    # bf16 is exact for int8-valued weights; z's bf16 rounding is far below
    # the int8 quantization noise floor.  Single-pass MXU matmul, f32 accum.
    z = z_ref[...].astype(jnp.bfloat16)
    w = w_ref[...].astype(jnp.bfloat16)
    acc = jnp.dot(z, w, preferred_element_type=jnp.float32)   # (TM, 512) f32

    # Dequant + bias epilogue: precomputed scale row, no iota/select needed.
    out_ref[...] = acc * affine_ref[0:1, :] + affine_ref[1:2, :]


def _quantize_int8(w):
    """Per-tensor symmetric int8 quantization (mimics the quantized decoder)."""
    scale = jnp.maximum(jnp.max(jnp.abs(w)), 1e-8) / 127.0
    w_q = jnp.clip(jnp.round(w / scale), -127, 127).astype(jnp.int8)
    return w_q, jnp.float32(scale)


def make_decoder_params(key):
    """Deterministic synthetic decoder parameters (two quantized heads, fused)."""
    k_wv, k_bv, k_ws, k_bs = jax.random.split(key, 4)
    w_vel = jax.random.normal(k_wv, (ENCODER_DIM, OUT_FEATURES), jnp.float32) * 0.02
    b_vel = jax.random.normal(k_bv, (OUT_FEATURES,), jnp.float32) * 0.01
    w_seis = jax.random.normal(k_ws, (ENCODER_DIM, OUT_FEATURES), jnp.float32) * 0.02
    b_seis = jax.random.normal(k_bs, (OUT_FEATURES,), jnp.float32) * 0.01

    wv_q, sv = _quantize_int8(w_vel)
    ws_q, ss = _quantize_int8(w_seis)

    # Fuse the two heads: (512, 512) int8 weight and a (2, 512) f32 affine
    # tensor holding the precomputed per-column scale row and the bias row.
    w_q = jnp.concatenate([wv_q, ws_q], axis=1)                    # (512, 512) int8
    scale_row = jnp.concatenate([jnp.full((OUT_FEATURES,), sv, jnp.float32),
                                 jnp.full((OUT_FEATURES,), ss, jnp.float32)])
    bias_row = jnp.concatenate([b_vel, b_seis])                    # (512,) f32
    affine = jnp.stack([scale_row, bias_row], axis=0)              # (2, 512) f32
    return dict(w_q=w_q, affine=affine)


def simple_quantized_model_forward(z, params):
    """z: (B, 512, 1, 1) NCHW latent -> (velocity, seismic), both (B, 1, 16, 16)."""
    batch = z.shape[0]
    z2d = z.reshape(batch, ENCODER_DIM)  # 1x1 spatial collapses to (B, C)

    # Pad the batch up to a multiple of TM=8 rows so the MXU never sees M=1
    # and the grid step size is one full f32 sublane tile.
    b_pad = ((batch + TM - 1) // TM) * TM
    if b_pad != batch:
        z2d = jnp.pad(z2d, ((0, b_pad - batch), (0, 0)))
    nb = b_pad // TM

    bytes_accessed = (ENCODER_DIM * FUSED_FEATURES            # int8 weights
                      + b_pad * ENCODER_DIM * 4               # z
                      + 2 * FUSED_FEATURES * 4                # affine
                      + b_pad * FUSED_FEATURES * 4)           # output

    out2d = pl.pallas_call(
        _decoder_kernel,
        out_shape=jax.ShapeDtypeStruct((b_pad, FUSED_FEATURES), jnp.float32),
        grid=(nb,),
        in_specs=[
            # Latent tile walks the batch; weights/affine use a constant block
            # index so Pallas DMAs them once and keeps them VMEM-resident.
            pl.BlockSpec((TM, ENCODER_DIM), lambda i: (i, 0)),
            pl.BlockSpec((ENCODER_DIM, FUSED_FEATURES), lambda i: (0, 0)),
            pl.BlockSpec((2, FUSED_FEATURES), lambda i: (0, 0)),
        ],
        out_specs=pl.BlockSpec((TM, FUSED_FEATURES), lambda i: (i, 0)),
        compiler_params=pltpu.CompilerParams(
            dimension_semantics=("parallel",)),   # shard batch across v7x's 2 TCs
        cost_estimate=pl.CostEstimate(
            flops=2 * b_pad * ENCODER_DIM * FUSED_FEATURES,
            bytes_accessed=bytes_accessed,
            transcendentals=0),
    )(z2d, params["w_q"], params["affine"])

    out2d = out2d[:batch]
    velocity = out2d[:, :OUT_FEATURES].reshape(batch, OUT_C, OUT_H, OUT_W)
    seismic = out2d[:, OUT_FEATURES:].reshape(batch, OUT_C, OUT_H, OUT_W)
    return velocity, seismic


def _reference_forward(z, params):
    """Pure-JAX f32 reference (dequantize weights, single fused matmul)."""
    batch = z.shape[0]
    z2d = z.reshape(batch, ENCODER_DIM)
    scale_row = params["affine"][0]
    bias_row = params["affine"][1]
    w_deq = params["w_q"].astype(jnp.float32) * scale_row[None, :]
    out = z2d @ w_deq + bias_row[None, :]
    vel = out[:, :OUT_FEATURES].reshape(batch, OUT_C, OUT_H, OUT_W)
    seis = out[:, OUT_FEATURES:].reshape(batch, OUT_C, OUT_H, OUT_W)
    return vel, seis


if __name__ == "__main__":
    root = jax.random.PRNGKey(0)
    k_params, k_noise = jax.random.split(root)

    params = make_decoder_params(k_params)

    # forward(): z = randn(batch_size=1, encoder_dim=512).view(1, 512, 1, 1)
    batch_size = 1
    z = jax.random.normal(k_noise, (batch_size, ENCODER_DIM), jnp.float32)
    z = z.reshape(batch_size, ENCODER_DIM, 1, 1)

    velocity, seismic = simple_quantized_model_forward(z, params)
    jax.block_until_ready((velocity, seismic))

    assert velocity.shape == (batch_size, OUT_C, OUT_H, OUT_W)
    assert seismic.shape == (batch_size, OUT_C, OUT_H, OUT_W)
    assert velocity.dtype == jnp.float32 and seismic.dtype == jnp.float32

    # Tolerance check against the f32 reference (bf16 matmul noise is far
    # below the int8 quantization noise floor).
    vel_ref, seis_ref = _reference_forward(z, params)
    np.testing.assert_allclose(np.asarray(velocity), np.asarray(vel_ref),
                               rtol=0.0, atol=0.05)
    np.testing.assert_allclose(np.asarray(seismic), np.asarray(seis_ref),
                               rtol=0.0, atol=0.05)

    print("KERNEL_OK")
</pallas_src>

<mosaic_0001>
module attributes {stable_mosaic.version = 11 : i64} {
  func.func @_decoder_kernel(%arg0: i32, %arg1: memref<8x512xf32, #tpu.memory_space<vmem>>, %arg2: memref<512x512xi8, #tpu.memory_space<vmem>>, %arg3: memref<2x512xf32, #tpu.memory_space<vmem>>, %arg4: memref<8x512xf32, #tpu.memory_space<vmem>>) attributes {dimension_semantics = [#tpu.dimension_semantics<parallel>], iteration_bounds = array<i64: 1>, scalar_prefetch = 0 : i64, scratch_operands = 0 : i64, tpu.core_type = #tpu.core_type<tc>, window_params = [{transform_indices = @transform_0, window_bounds = array<i64: 8, 512>}, {pipeline_mode = #tpu.pipeline_mode<synchronous>, transform_indices = @transform_1, window_bounds = array<i64: 512, 512>}, {pipeline_mode = #tpu.pipeline_mode<synchronous>, transform_indices = @transform_2, window_bounds = array<i64: 2, 512>}, {transform_indices = @transform_3, window_bounds = array<i64: 8, 512>}]} {
    %c0 = arith.constant 0 : index
    %c0_0 = arith.constant 0 : index
    %0 = vector.load %arg1[%c0, %c0_0] : memref<8x512xf32, #tpu.memory_space<vmem>>, vector<8x512xf32>
    %1 = arith.truncf %0 : vector<8x512xf32> to vector<8x512xbf16>
    %c0_1 = arith.constant 0 : index
    %c0_2 = arith.constant 0 : index
    %2 = vector.load %arg2[%c0_1, %c0_2] : memref<512x512xi8, #tpu.memory_space<vmem>>, vector<512x512xi8>
    %3 = arith.sitofp %2 : vector<512x512xi8> to vector<512x512xbf16>
    %cst = arith.constant dense<0.000000e+00> : vector<8x512xf32>
    %4 = tpu.matmul %1, %3, %cst {dimension_numbers = #tpu.dot_dimension_numbers<[1], [0], [0], [1], [0, 0, 1, 1], [], []>} : vector<8x512xbf16>, vector<512x512xbf16>, vector<8x512xf32> -> vector<8x512xf32>
    %c0_3 = arith.constant 0 : index
    %c0_4 = arith.constant 0 : index
    %5 = vector.load %arg3[%c0_3, %c0_4] : memref<2x512xf32, #tpu.memory_space<vmem>>, vector<1x512xf32>
    %6 = vector.broadcast %5 : vector<1x512xf32> to vector<8x512xf32>
    %7 = arith.mulf %4, %6 : vector<8x512xf32>
    %c1 = arith.constant 1 : index
    %c0_5 = arith.constant 0 : index
    %8 = vector.load %arg3[%c1, %c0_5] : memref<2x512xf32, #tpu.memory_space<vmem>>, vector<1x512xf32>
    %9 = vector.broadcast %8 : vector<1x512xf32> to vector<8x512xf32>
    %10 = arith.addf %7, %9 : vector<8x512xf32>
    %c0_6 = arith.constant 0 : index
    %c0_7 = arith.constant 0 : index
    %11 = vector.load %arg4[%c0_6, %c0_7] : memref<8x512xf32, #tpu.memory_space<vmem>>, vector<8x512xf32>
    tpu.vector_store %arg4[%c0_6, %c0_7], %10 {strides = array<i32>} : memref<8x512xf32, #tpu.memory_space<vmem>>, vector<8x512xf32>,
    return
  }
  func.func @transform_0(%arg0: i32) -> (i32, i32) {
    %c0_i32 = arith.constant 0 : i32
    %c0_i32_0 = arith.constant 0 : i32
    return %arg0, %c0_i32 : i32, i32
  }
  func.func @transform_1(%arg0: i32) -> (i32, i32) {
    %c0_i32 = arith.constant 0 : i32
    %c0_i32_0 = arith.constant 0 : i32
    %c0_i32_1 = arith.constant 0 : i32
    return %c0_i32, %c0_i32_0 : i32, i32
  }
  func.func @transform_2(%arg0: i32) -> (i32, i32) {
    %c0_i32 = arith.constant 0 : i32
    %c0_i32_0 = arith.constant 0 : i32
    %c0_i32_1 = arith.constant 0 : i32
    return %c0_i32, %c0_i32_0 : i32, i32
  }
  func.func @transform_3(%arg0: i32) -> (i32, i32) {
    %c0_i32 = arith.constant 0 : i32
    %c0_i32_0 = arith.constant 0 : i32
    return %arg0, %c0_i32 : i32, i32
  }
}

</mosaic_0001>

<llo_original>
// kernel: tpu_custom_call.1
$region0: #{tpu_custom_call.1}
  #allocation0 [shape = 'u32[]', space=smem, size = 0x4, offset = 0x4, fixed_abs, tag = 'smem constant byte address 0x4 - core index']
  #allocation1 [shape = 'u32[144,128]{1,0:T(1,128)}', space=vmem, size = 0x12000, scoped, tag = 'internal scratch']
  %s0 = inlined_call_operand.hbm [shape: f32[8,512], index: 0, kind: input, shape index: {}]
  %s1 = inlined_call_operand.hbm [shape: s8[512,512], index: 1, kind: input, shape index: {}]
  %s2 = inlined_call_operand.hbm [shape: f32[2,512], index: 2, kind: input, shape index: {}]
  %s3 = inlined_call_operand.hbm [shape: f32[8,512], index: 3, kind: output, shape index: {}]
  %s4 = sld [smem:[#allocation0]]
  $region34: #{tpu_custom_call.1} parent=0
    _
  %s6 = ssub.s32 1, %s4
  %s7 = scalar_select 0, %s6, %s4
  $region1: #{tpu_custom_call.1} parent=0
    #allocation2 [shape = 'u8[16384]{0}', space=vmem, size = 0x4000, scoped, tag = 'input window, operand 0, single buffered']
    #allocation3 [shape = 's32[1]{0}', space=sflag, size = 0x4, scoped, tag = 'scoped memory for tpu_custom_call.1']
    #allocation4 [shape = 's32[1]{0}', space=sflag, size = 0x4, scoped, tag = 'scoped memory for tpu_custom_call.1']
    #allocation5 [shape = 'u8[262144]{0}', space=vmem, size = 0x40000, scoped, tag = 'input window, operand 1, single buffered']
    #allocation6 [shape = 's32[1]{0}', space=sflag, size = 0x4, scoped, tag = 'scoped memory for tpu_custom_call.1']
    #allocation7 [shape = 'u8[4096]{0}', space=vmem, size = 0x1000, scoped, tag = 'input window, operand 2, single buffered']
    #allocation8 [shape = 'u8[16384]{0}', space=vmem, size = 0x4000, scoped, tag = 'output window, operand 0, single buffered']
    %8 = vsyncpa [#allocation3], 0
    %9 = vsyncpa [#allocation6], 0
    %10 = vsyncpa [#allocation4], 0
    // Predicated region
    $region2: #{tpu_custom_call.1} parent=1 // pred_check
      _
    $region3: #{tpu_custom_call.1} parent=1 // pred_check_branch
      %12 = sbr.rel (0) target = $region5
    $region4: #{tpu_custom_call.1} parent=1 // pred_region
      %s14 = ssub.s32 512, 512
      %15 = vsyncadd [#allocation3], %s14
      %s17 = sshll.u32 [#allocation2], 4
      %s18 = int_to_ptr.vmem [resolvable:$true] %s17
      %20 = dma.hbm_to_vmem [thread:$0]  %s0, 512, %s18, [#allocation3]
    $region5: #{tpu_custom_call.1} parent=1 // pred_fallthru
      _
    // Predicated region
    $region6: #{tpu_custom_call.1} parent=1 // pred_check
      _
    $region7: #{tpu_custom_call.1} parent=1 // pred_check_branch
      %22 = sbr.rel (0) target = $region9
    $region8: #{tpu_custom_call.1} parent=1 // pred_region
      %s24 = ssub.s32 8192, 8192
      %25 = vsyncadd [#allocation6], %s24
      %s26 = sshll.u32 [#allocation5], 4
      %s27 = int_to_ptr.vmem [resolvable:$true] %s26
      %32 = dma.hbm_to_vmem [thread:$0]  %s1, 8192, %s27, [#allocation6], 512, 512, 32
    $region9: #{tpu_custom_call.1} parent=1 // pred_fallthru
      _
    // Predicated region
    $region10: #{tpu_custom_call.1} parent=1 // pred_check
      _
    $region11: #{tpu_custom_call.1} parent=1 // pred_check_branch
      %34 = sbr.rel (0) target = $region13
    $region12: #{tpu_custom_call.1} parent=1 // pred_region
      %s36 = ssub.s32 128, 128
      %37 = vsyncadd [#allocation6], %s36
      %s39 = sshll.u32 [#allocation7], 4
      %s40 = int_to_ptr.vmem [resolvable:$true] %s39
      %42 = dma.hbm_to_vmem [thread:$0]  %s2, 128, %s40, [#allocation6]
    $region13: #{tpu_custom_call.1} parent=1 // pred_fallthru
      _
    // Predicated region
    $region14: #{tpu_custom_call.1} parent=1 // pred_check
      _
    $region15: #{tpu_custom_call.1} parent=1 // pred_check_branch
      %44 = sbr.rel (0) target = $region17
    $region16: #{tpu_custom_call.1} parent=1 // pred_region
      %45 = dma.done [#allocation3], 512
    $region17: #{tpu_custom_call.1} parent=1 // pred_fallthru
      _
    // Predicated region
    $region18: #{tpu_custom_call.1} parent=1 // pred_check
      _
    $region19: #{tpu_custom_call.1} parent=1 // pred_check_branch
      %47 = sbr.rel (0) target = $region21
    $region20: #{tpu_custom_call.1} parent=1 // pred_region
      %48 = dma.done [#allocation6], 8192
    $region21: #{tpu_custom_call.1} parent=1 // pred_fallthru
      _
    // Predicated region
    $region22: #{tpu_custom_call.1} parent=1 // pred_check
      _
    $region23: #{tpu_custom_call.1} parent=1 // pred_check_branch
      %50 = sbr.rel (0) target = $region25
    $region24: #{tpu_custom_call.1} parent=1 // pred_region
      %51 = dma.done [#allocation6], 128
    $region25: #{tpu_custom_call.1} parent=1 // pred_fallthru
      _
    %v52 = vld [vmem:[#allocation2] sm:$0xff]
    %v53 = vld [vmem:[#allocation2 + $0x8] sm:$0xff]
    %v54 = vld [vmem:[#allocation2 + $0x10] sm:$0xff]
    %v55 = vld [vmem:[#allocation2 + $0x18] sm:$0xff]
    %v56 = vpack.c.bf16 %v52, %v52
    %v57 = vpack.c.bf16 %v53, %v53
    %v58 = vpack.c.bf16 %v54, %v54
    %v59 = vpack.c.bf16 %v55, %v55
    %v60 = vld [vmem:[#allocation5] sm:$0xff]
    %v61 = vld [vmem:[#allocation5 + $0x8] sm:$0xff]
    %v62 = vld [vmem:[#allocation5 + $0x10] sm:$0xff]
    %v63 = vld [vmem:[#allocation5 + $0x18] sm:$0xff]
    %v64 = vld [vmem:[#allocation5 + $0x20] sm:$0xff]
    %v65 = vld [vmem:[#allocation5 + $0x28] sm:$0xff]
    %v66 = vld [vmem:[#allocation5 + $0x30] sm:$0xff]
    %v67 = vld [vmem:[#allocation5 + $0x38] sm:$0xff]
    %v68 = vld [vmem:[#allocation5 + $0x40] sm:$0xff]
    %v69 = vld [vmem:[#allocation5 + $0x48] sm:$0xff]
    %v70 = vld [vmem:[#allocation5 + $0x50] sm:$0xff]
    %v71 = vld [vmem:[#allocation5 + $0x58] sm:$0xff]
    %v72 = vld [vmem:[#allocation5 + $0x60] sm:$0xff]
    %v73 = vld [vmem:[#allocation5 + $0x68] sm:$0xff]
    %v74 = vld [vmem:[#allocation5 + $0x70] sm:$0xff]
    %v75 = vld [vmem:[#allocation5 + $0x78] sm:$0xff]
    %v76 = vld [vmem:[#allocation5 + $0x80] sm:$0xff]
    %v77 = vld [vmem:[#allocation5 + $0x88] sm:$0xff]
    %v78 = vld [vmem:[#allocation5 + $0x90] sm:$0xff]
    %v79 = vld [vmem:[#allocation5 + $0x98] sm:$0xff]
    %v80 = vld [vmem:[#allocation5 + $0xa0] sm:$0xff]
    %v81 = vld [vmem:[#allocation5 + $0xa8] sm:$0xff]
    %v82 = vld [vmem:[#allocation5 + $0xb0] sm:$0xff]
    %v83 = vld [vmem:[#allocation5 + $0xb8] sm:$0xff]
    %v84 = vld [vmem:[#allocation5 + $0xc0] sm:$0xff]
    %v85 = vld [vmem:[#allocation5 + $0xc8] sm:$0xff]
    %v86 = vld [vmem:[#allocation5 + $0xd0] sm:$0xff]
    %v87 = vld [vmem:[#allocation5 + $0xd8] sm:$0xff]
    %v88 = vld [vmem:[#allocation5 + $0xe0] sm:$0xff]
    %v89 = vld [vmem:[#allocation5 + $0xe8] sm:$0xff]
    %v90 = vld [vmem:[#allocation5 + $0xf0] sm:$0xff]
    %v91 = vld [vmem:[#allocation5 + $0xf8] sm:$0xff]
    %v92 = vld [vmem:[#allocation5 + $0x100] sm:$0xff]
    %v93 = vld [vmem:[#allocation5 + $0x108] sm:$0xff]
    %v94 = vld [vmem:[#allocation5 + $0x110] sm:$0xff]
    %v95 = vld [vmem:[#allocation5 + $0x118] sm:$0xff]
    %v96 = vld [vmem:[#allocation5 + $0x120] sm:$0xff]
    %v97 = vld [vmem:[#allocation5 + $0x128] sm:$0xff]
    %v98 = vld [vmem:[#allocation5 + $0x130] sm:$0xff]
    %v99 = vld [vmem:[#allocation5 + $0x138] sm:$0xff]
    %v100 = vld [vmem:[#allocation5 + $0x140] sm:$0xff]
    %v101 = vld [vmem:[#allocation5 + $0x148] sm:$0xff]
    %v102 = vld [vmem:[#allocation5 + $0x150] sm:$0xff]
    %v103 = vld [vmem:[#allocation5 + $0x158] sm:$0xff]
    %v104 = vld [vmem:[#allocation5 + $0x160] sm:$0xff]
    %v105 = vld [vmem:[#allocation5 + $0x168] sm:$0xff]
    %v106 = vld [vmem:[#allocation5 + $0x170] sm:$0xff]
    %v107 = vld [vmem:[#allocation5 + $0x178] sm:$0xff]
    %v108 = vld [vmem:[#allocation5 + $0x180] sm:$0xff]
    %v109 = vld [vmem:[#allocation5 + $0x188] sm:$0xff]
    %v110 = vld [vmem:[#allocation5 + $0x190] sm:$0xff]
    %v111 = vld [vmem:[#allocation5 + $0x198] sm:$0xff]
    %v112 = vld [vmem:[#allocation5 + $0x1a0] sm:$0xff]
    %v113 = vld [vmem:[#allocation5 + $0x1a8] sm:$0xff]
    %v114 = vld [vmem:[#allocation5 + $0x1b0] sm:$0xff]
    %v115 = vld [vmem:[#allocation5 + $0x1b8] sm:$0xff]
    %v116 = vld [vmem:[#allocation5 + $0x1c0] sm:$0xff]
    %v117 = vld [vmem:[#allocation5 + $0x1c8] sm:$0xff]
    %v118 = vld [vmem:[#allocation5 + $0x1d0] sm:$0xff]
    %v119 = vld [vmem:[#allocation5 + $0x1d8] sm:$0xff]
    %v120 = vld [vmem:[#allocation5 + $0x1e0] sm:$0xff]
    %v121 = vld [vmem:[#allocation5 + $0x1e8] sm:$0xff]
    %v122 = vld [vmem:[#allocation5 + $0x1f0] sm:$0xff]
    %v123 = vld [vmem:[#allocation5 + $0x1f8] sm:$0xff]
    %v124 = vunpack.c.l.s8.bf16 %v60
    %v125 = vunpack.c.l.s8.bf16 %v61
    %v126 = vunpack.c.l.s8.bf16 %v62
    %v127 = vunpack.c.l.s8.bf16 %v63
    %v128 = vunpack.c.h.s8.bf16 %v60
    %v129 = vunpack.c.h.s8.bf16 %v61
    %v130 = vunpack.c.h.s8.bf16 %v62
    %v131 = vunpack.c.h.s8.bf16 %v63
    %v132 = vunpack.c.l.s8.bf16 %v64
    %v133 = vunpack.c.l.s8.bf16 %v65
    %v134 = vunpack.c.l.s8.bf16 %v66
    %v135 = vunpack.c.l.s8.bf16 %v67
    %v136 = vunpack.c.h.s8.bf16 %v64
    %v137 = vunpack.c.h.s8.bf16 %v65
    %v138 = vunpack.c.h.s8.bf16 %v66
    %v139 = vunpack.c.h.s8.bf16 %v67
    %v140 = vunpack.c.l.s8.bf16 %v68
    %v141 = vunpack.c.l.s8.bf16 %v69
    %v142 = vunpack.c.l.s8.bf16 %v70
    %v143 = vunpack.c.l.s8.bf16 %v71
    %v144 = vunpack.c.h.s8.bf16 %v68
    %v145 = vunpack.c.h.s8.bf16 %v69
    %v146 = vunpack.c.h.s8.bf16 %v70
    %v147 = vunpack.c.h.s8.bf16 %v71
    %v148 = vunpack.c.l.s8.bf16 %v72
    %v149 = vunpack.c.l.s8.bf16 %v73
    %v150 = vunpack.c.l.s8.bf16 %v74
    %v151 = vunpack.c.l.s8.bf16 %v75
    %v152 = vunpack.c.h.s8.bf16 %v72
    %v153 = vunpack.c.h.s8.bf16 %v73
    %v154 = vunpack.c.h.s8.bf16 %v74
    %v155 = vunpack.c.h.s8.bf16 %v75
    %v156 = vunpack.c.l.s8.bf16 %v76
    %v157 = vunpack.c.l.s8.bf16 %v77
    %v158 = vunpack.c.l.s8.bf16 %v78
    %v159 = vunpack.c.l.s8.bf16 %v79
    %v160 = vunpack.c.h.s8.bf16 %v76
    %v161 = vunpack.c.h.s8.bf16 %v77
    %v162 = vunpack.c.h.s8.bf16 %v78
    %v163 = vunpack.c.h.s8.bf16 %v79
    %v164 = vunpack.c.l.s8.bf16 %v80
    %v165 = vunpack.c.l.s8.bf16 %v81
    %v166 = vunpack.c.l.s8.bf16 %v82
    %v167 = vunpack.c.l.s8.bf16 %v83
    %v168 = vunpack.c.h.s8.bf16 %v80
    %v169 = vunpack.c.h.s8.bf16 %v81
    %v170 = vunpack.c.h.s8.bf16 %v82
    %v171 = vunpack.c.h.s8.bf16 %v83
    %v172 = vunpack.c.l.s8.bf16 %v84
    %v173 = vunpack.c.l.s8.bf16 %v85
    %v174 = vunpack.c.l.s8.bf16 %v86
    %v175 = vunpack.c.l.s8.bf16 %v87
    %v176 = vunpack.c.h.s8.bf16 %v84
    %v177 = vunpack.c.h.s8.bf16 %v85
    %v178 = vunpack.c.h.s8.bf16 %v86
    %v179 = vunpack.c.h.s8.bf16 %v87
    %v180 = vunpack.c.l.s8.bf16 %v88
    %v181 = vunpack.c.l.s8.bf16 %v89
    %v182 = vunpack.c.l.s8.bf16 %v90
    %v183 = vunpack.c.l.s8.bf16 %v91
    %v184 = vunpack.c.h.s8.bf16 %v88
    %v185 = vunpack.c.h.s8.bf16 %v89
    %v186 = vunpack.c.h.s8.bf16 %v90
    %v187 = vunpack.c.h.s8.bf16 %v91
    %v188 = vunpack.c.l.s8.bf16 %v92
    %v189 = vunpack.c.l.s8.bf16 %v93
    %v190 = vunpack.c.l.s8.bf16 %v94
    %v191 = vunpack.c.l.s8.bf16 %v95
    %v192 = vunpack.c.h.s8.bf16 %v92
    %v193 = vunpack.c.h.s8.bf16 %v93
    %v194 = vunpack.c.h.s8.bf16 %v94
    %v195 = vunpack.c.h.s8.bf16 %v95
    %v196 = vunpack.c.l.s8.bf16 %v96
    %v197 = vunpack.c.l.s8.bf16 %v97
    %v198 = vunpack.c.l.s8.bf16 %v98
    %v199 = vunpack.c.l.s8.bf16 %v99
    %v200 = vunpack.c.h.s8.bf16 %v96
    %v201 = vunpack.c.h.s8.bf16 %v97
    %v202 = vunpack.c.h.s8.bf16 %v98
    %v203 = vunpack.c.h.s8.bf16 %v99
    %v204 = vunpack.c.l.s8.bf16 %v100
    %v205 = vunpack.c.l.s8.bf16 %v101
    %v206 = vunpack.c.l.s8.bf16 %v102
    %v207 = vunpack.c.l.s8.bf16 %v103
    %v208 = vunpack.c.h.s8.bf16 %v100
    %v209 = vunpack.c.h.s8.bf16 %v101
    %v210 = vunpack.c.h.s8.bf16 %v102
    %v211 = vunpack.c.h.s8.bf16 %v103
    %v212 = vunpack.c.l.s8.bf16 %v104
    %v213 = vunpack.c.l.s8.bf16 %v105
    %v214 = vunpack.c.l.s8.bf16 %v106
    %v215 = vunpack.c.l.s8.bf16 %v107
    %v216 = vunpack.c.h.s8.bf16 %v104
    %v217 = vunpack.c.h.s8.bf16 %v105
    %v218 = vunpack.c.h.s8.bf16 %v106
    %v219 = vunpack.c.h.s8.bf16 %v107
    %v220 = vunpack.c.l.s8.bf16 %v108
    %v221 = vunpack.c.l.s8.bf16 %v109
    %v222 = vunpack.c.l.s8.bf16 %v110
    %v223 = vunpack.c.l.s8.bf16 %v111
    %v224 = vunpack.c.h.s8.bf16 %v108
    %v225 = vunpack.c.h.s8.bf16 %v109
    %v226 = vunpack.c.h.s8.bf16 %v110
    %v227 = vunpack.c.h.s8.bf16 %v111
    %v228 = vunpack.c.l.s8.bf16 %v112
    %v229 = vunpack.c.l.s8.bf16 %v113
    %v230 = vunpack.c.l.s8.bf16 %v114
    %v231 = vunpack.c.l.s8.bf16 %v115
    %v232 = vunpack.c.h.s8.bf16 %v112
    %v233 = vunpack.c.h.s8.bf16 %v113
    %v234 = vunpack.c.h.s8.bf16 %v114
    %v235 = vunpack.c.h.s8.bf16 %v115
    %v236 = vunpack.c.l.s8.bf16 %v116
    %v237 = vunpack.c.l.s8.bf16 %v117
    %v238 = vunpack.c.l.s8.bf16 %v118
    %v239 = vunpack.c.l.s8.bf16 %v119
    %v240 = vunpack.c.h.s8.bf16 %v116
    %v241 = vunpack.c.h.s8.bf16 %v117
    %v242 = vunpack.c.h.s8.bf16 %v118
    %v243 = vunpack.c.h.s8.bf16 %v119
    %v244 = vunpack.c.l.s8.bf16 %v120
    %v245 = vunpack.c.l.s8.bf16 %v121
    %v246 = vunpack.c.l.s8.bf16 %v122
    %v247 = vunpack.c.l.s8.bf16 %v123
    %v248 = vunpack.c.h.s8.bf16 %v120
    %v249 = vunpack.c.h.s8.bf16 %v121
    %v250 = vunpack.c.h.s8.bf16 %v122
    %v251 = vunpack.c.h.s8.bf16 %v123
    %252 = vmatprep.subr.bf16.mxu0 %v125
    %253 = vmatpush1.bf16.msra.mxu0 %v124
    %254 = vmatprep.subr.bf16.mxu0 %v129
    %255 = vmatpush1.bf16.msra.mxu0 %v128
    %256 = vmatprep.subr.bf16.mxu0 %v133
    %257 = vmatpush1.bf16.msra.mxu0 %v132
    %258 = vmatprep.subr.bf16.mxu0 %v137
    %259 = vmatpush1.bf16.msra.mxu0 %v136
    %260 = vmatprep.subr.bf16.mxu0 %v141
    %261 = vmatpush1.bf16.msra.mxu0 %v140
    %262 = vmatprep.subr.bf16.mxu0 %v145
    %263 = vmatpush1.bf16.msra.mxu0 %v144
    %264 = vmatprep.subr.bf16.mxu0 %v149
    %265 = vmatpush1.bf16.msra.mxu0 %v148
    %266 = vmatprep.subr.bf16.mxu0 %v153
    %267 = vmatpush1.bf16.msra.mxu0 %v152
    %268 = vmatprep.subr.bf16.mxu0 %v157
    %269 = vmatpush1.bf16.msra.mxu0 %v156
    %270 = vmatprep.subr.bf16.mxu0 %v161
    %271 = vmatpush1.bf16.msra.mxu0 %v160
    %272 = vmatprep.subr.bf16.mxu0 %v165
    %273 = vmatpush1.bf16.msra.mxu0 %v164
    %274 = vmatprep.subr.bf16.mxu0 %v169
    %275 = vmatpush1.bf16.msra.mxu0 %v168
    %276 = vmatprep.subr.bf16.mxu0 %v173
    %277 = vmatpush1.bf16.msra.mxu0 %v172
    %278 = vmatprep.subr.bf16.mxu0 %v177
    %279 = vmatpush1.bf16.msra.mxu0 %v176
    %280 = vmatprep.subr.bf16.mxu0 %v181
    %281 = vmatpush1.bf16.msra.mxu0 %v180
    %282 = vmatprep.subr.bf16.mxu0 %v185
    %283 = vmatpush1.bf16.msra.mxu0 %v184
    %284 = vmatprep.mubr.bf16.mxu0 %v57
    %285 = vmatmul.mubr.bf16.gmra.mrb[0].mxu0 %v56
    %v286 = vpop.f32.mrb[0].mxu0
    %v287 = vadd.f32 0.0, %v286
    %v288 = vpop.f32.mrb[0].mxu0
    %v289 = vadd.f32 0.0, %v288
    %v290 = vpop.f32.mrb[0].mxu0
    %v291 = vpop.f32.mrb[0].mxu0
    %292 = vdwg.mxu0
    %293 = vmatprep.subr.bf16.mxu0 %v189
    %294 = vmatpush1.bf16.msra.mxu0 %v188
    %295 = vmatprep.subr.bf16.mxu0 %v193
    %296 = vmatpush1.bf16.msra.mxu0 %v192
    %297 = vmatprep.subr.bf16.mxu0 %v197
    %298 = vmatpush1.bf16.msra.mxu0 %v196
    %299 = vmatprep.subr.bf16.mxu0 %v201
    %300 = vmatpush1.bf16.msra.mxu0 %v200
    %301 = vmatprep.subr.bf16.mxu0 %v205
    %302 = vmatpush1.bf16.msra.mxu0 %v204
    %303 = vmatprep.subr.bf16.mxu0 %v209
    %304 = vmatpush1.bf16.msra.mxu0 %v208
    %305 = vmatprep.subr.bf16.mxu0 %v213
    %306 = vmatpush1.bf16.msra.mxu0 %v212
    %307 = vmatprep.subr.bf16.mxu0 %v217
    %308 = vmatpush1.bf16.msra.mxu0 %v216
    %309 = vmatprep.subr.bf16.mxu0 %v221
    %310 = vmatpush1.bf16.msra.mxu0 %v220
    %311 = vmatprep.subr.bf16.mxu0 %v225
    %312 = vmatpush1.bf16.msra.mxu0 %v224
    %313 = vmatprep.subr.bf16.mxu0 %v229
    %314 = vmatpush1.bf16.msra.mxu0 %v228
    %315 = vmatprep.subr.bf16.mxu0 %v233
    %316 = vmatpush1.bf16.msra.mxu0 %v232
    %317 = vmatprep.subr.bf16.mxu0 %v237
    %318 = vmatpush1.bf16.msra.mxu0 %v236
    %319 = vmatprep.subr.bf16.mxu0 %v241
    %320 = vmatpush1.bf16.msra.mxu0 %v240
    %321 = vmatprep.subr.bf16.mxu0 %v245
    %322 = vmatpush1.bf16.msra.mxu0 %v244
    %323 = vmatprep.subr.bf16.mxu0 %v249
    %324 = vmatpush1.bf16.msra.mxu0 %v248
    %325 = vmatprep.mubr.bf16.mxu0 %v59
    %326 = vmatmul.mubr.bf16.gmra.mrb[0].mxu0 %v58
    %v327 = vpop.f32.mrb[0].mxu0
    %v328 = vadd.f32 %v287, %v327
    %v329 = vpop.f32.mrb[0].mxu0
    %v330 = vadd.f32 %v289, %v329
    %v331 = vpop.f32.mrb[0].mxu0
    %v332 = vpop.f32.mrb[0].mxu0
    %333 = vdwg.mxu0
    %334 = vmatprep.subr.bf16.mxu0 %v127
    %335 = vmatpush1.bf16.msra.mxu0 %v126
    %336 = vmatprep.subr.bf16.mxu0 %v131
    %337 = vmatpush1.bf16.msra.mxu0 %v130
    %338 = vmatprep.subr.bf16.mxu0 %v135
    %339 = vmatpush1.bf16.msra.mxu0 %v134
    %340 = vmatprep.subr.bf16.mxu0 %v139
    %341 = vmatpush1.bf16.msra.mxu0 %v138
    %342 = vmatprep.subr.bf16.mxu0 %v143
    %343 = vmatpush1.bf16.msra.mxu0 %v142
    %344 = vmatprep.subr.bf16.mxu0 %v147
    %345 = vmatpush1.bf16.msra.mxu0 %v146
    %346 = vmatprep.subr.bf16.mxu0 %v151
    %347 = vmatpush1.bf16.msra.mxu0 %v150
    %348 = vmatprep.subr.bf16.mxu0 %v155
    %349 = vmatpush1.bf16.msra.mxu0 %v154
    %350 = vmatprep.subr.bf16.mxu0 %v159
    %351 = vmatpush1.bf16.msra.mxu0 %v158
    %352 = vmatprep.subr.bf16.mxu0 %v163
    %353 = vmatpush1.bf16.msra.mxu0 %v162
    %354 = vmatprep.subr.bf16.mxu0 %v167
    %355 = vmatpush1.bf16.msra.mxu0 %v166
    %356 = vmatprep.subr.bf16.mxu0 %v171
    %357 = vmatpush1.bf16.msra.mxu0 %v170
    %358 = vmatprep.subr.bf16.mxu0 %v175
    %359 = vmatpush1.bf16.msra.mxu0 %v174
    %360 = vmatprep.subr.bf16.mxu0 %v179
    %361 = vmatpush1.bf16.msra.mxu0 %v178
    %362 = vmatprep.subr.bf16.mxu0 %v183
    %363 = vmatpush1.bf16.msra.mxu0 %v182
    %364 = vmatprep.subr.bf16.mxu0 %v187
    %365 = vmatpush1.bf16.msra.mxu0 %v186
    %366 = vmatprep.mubr.bf16.mxu0 %v57
    %367 = vmatmul.mubr.bf16.gmra.mrb[0].mxu0 %v56
    %v368 = vpop.f32.mrb[0].mxu0
    %v369 = vadd.f32 0.0, %v368
    %v370 = vpop.f32.mrb[0].mxu0
    %v371 = vadd.f32 0.0, %v370
    %v372 = vpop.f32.mrb[0].mxu0
    %v373 = vpop.f32.mrb[0].mxu0
    %374 = vdwg.mxu0
    %375 = vmatprep.subr.bf16.mxu0 %v191
    %376 = vmatpush1.bf16.msra.mxu0 %v190
    %377 = vmatprep.subr.bf16.mxu0 %v195
    %378 = vmatpush1.bf16.msra.mxu0 %v194
    %379 = vmatprep.subr.bf16.mxu0 %v199
    %380 = vmatpush1.bf16.msra.mxu0 %v198
    %381 = vmatprep.subr.bf16.mxu0 %v203
    %382 = vmatpush1.bf16.msra.mxu0 %v202
    %383 = vmatprep.subr.bf16.mxu0 %v207
    %384 = vmatpush1.bf16.msra.mxu0 %v206
    %385 = vmatprep.subr.bf16.mxu0 %v211
    %386 = vmatpush1.bf16.msra.mxu0 %v210
    %387 = vmatprep.subr.bf16.mxu0 %v215
    %388 = vmatpush1.bf16.msra.mxu0 %v214
    %389 = vmatprep.subr.bf16.mxu0 %v219
    %390 = vmatpush1.bf16.msra.mxu0 %v218
    %391 = vmatprep.subr.bf16.mxu0 %v223
    %392 = vmatpush1.bf16.msra.mxu0 %v222
    %393 = vmatprep.subr.bf16.mxu0 %v227
    %394 = vmatpush1.bf16.msra.mxu0 %v226
    %395 = vmatprep.subr.bf16.mxu0 %v231
    %396 = vmatpush1.bf16.msra.mxu0 %v230
    %397 = vmatprep.subr.bf16.mxu0 %v235
    %398 = vmatpush1.bf16.msra.mxu0 %v234
    %399 = vmatprep.subr.bf16.mxu0 %v239
    %400 = vmatpush1.bf16.msra.mxu0 %v238
    %401 = vmatprep.subr.bf16.mxu0 %v243
    %402 = vmatpush1.bf16.msra.mxu0 %v242
    %403 = vmatprep.subr.bf16.mxu0 %v247
    %404 = vmatpush1.bf16.msra.mxu0 %v246
    %405 = vmatprep.subr.bf16.mxu0 %v251
    %406 = vmatpush1.bf16.msra.mxu0 %v250
    %407 = vmatprep.mubr.bf16.mxu0 %v59
    %408 = vmatmul.mubr.bf16.gmra.mrb[0].mxu0 %v58
    %v409 = vpop.f32.mrb[0].mxu0
    %v410 = vadd.f32 %v369, %v409
    %v411 = vpop.f32.mrb[0].mxu0
    %v412 = vadd.f32 %v371, %v411
    %v413 = vpop.f32.mrb[0].mxu0
    %v414 = vpop.f32.mrb[0].mxu0
    %415 = vdwg.mxu0
    %v416 = vld [vmem:[#allocation7] ss:$2 sm:$0xf]
    %v418 = vlaneseq
    %v419 = vshrl.u32 %v418, 7
    %v420 = vsub.s32 0, %v419
    %v421 = vrot.slane %v416, %v420
    %v422 = vlaneseq
    %v423 = vshrl.u32 %v422, 7
    %v424 = vsub.s32 1, %v423
    %v425 = vrot.slane %v416, %v424
    %v426 = vlaneseq
    %v427 = vshrl.u32 %v426, 7
    %v428 = vsub.s32 2, %v427
    %v429 = vrot.slane %v416, %v428
    %v430 = vlaneseq
    %v431 = vshrl.u32 %v430, 7
    %v432 = vsub.s32 3, %v431
    %v433 = vrot.slane %v416, %v432
    %v438 = vmul.f32 %v328, %v421
    %v439 = vmul.f32 %v330, %v425
    %v440 = vmul.f32 %v410, %v429
    %v441 = vmul.f32 %v412, %v433
    %s442 = scalar_lea.vmem [#allocation7], 1
    %v443 = vld [vmem:[%s442] ss:$2 sm:$0xf]
    %v445 = vlaneseq
    %v446 = vshrl.u32 %v445, 7
    %v447 = vsub.s32 0, %v446
    %v448 = vrot.slane %v443, %v447
    %v449 = vlaneseq
    %v450 = vshrl.u32 %v449, 7
    %v451 = vsub.s32 1, %v450
    %v452 = vrot.slane %v443, %v451
    %v453 = vlaneseq
    %v454 = vshrl.u32 %v453, 7
    %v455 = vsub.s32 2, %v454
    %v456 = vrot.slane %v443, %v455
    %v457 = vlaneseq
    %v458 = vshrl.u32 %v457, 7
    %v459 = vsub.s32 3, %v458
    %v460 = vrot.slane %v443, %v459
    %v465 = vadd.f32 %v438, %v448
    %v466 = vadd.f32 %v439, %v452
    %v467 = vadd.f32 %v440, %v456
    %v468 = vadd.f32 %v441, %v460
    %469 = vst [vmem:[#allocation8] sm:$0xff] %v465
    %470 = vst [vmem:[#allocation8 + $0x8] sm:$0xff] %v466
    %471 = vst [vmem:[#allocation8 + $0x10] sm:$0xff] %v467
    %472 = vst [vmem:[#allocation8 + $0x18] sm:$0xff] %v468
    // Predicated region
    $region26: #{tpu_custom_call.1} parent=1 // pred_check
      _
    $region27: #{tpu_custom_call.1} parent=1 // pred_check_branch
      %474 = sbr.rel (0) target = $region29
    $region28: #{tpu_custom_call.1} parent=1 // pred_region
      %s476 = ssub.s32 512, 512
      %477 = vsyncadd [#allocation4], %s476
      %s479 = sshll.u32 [#allocation8], 4
      %s480 = int_to_ptr.vmem [resolvable:$true] %s479
      %482 = dma.vmem_to_hbm [thread:$0]  %s480, 512, %s3, [#allocation4]
    $region29: #{tpu_custom_call.1} parent=1 // pred_fallthru
      _
    // Predicated region
    $region30: #{tpu_custom_call.1} parent=1 // pred_check
      _
    $region31: #{tpu_custom_call.1} parent=1 // pred_check_branch
      %484 = sbr.rel (0) target = $region33
    $region32: #{tpu_custom_call.1} parent=1 // pred_region
      %485 = dma.done [#allocation4], 512
    $region33: #{tpu_custom_call.1} parent=1 // pred_fallthru
      _
    %486 = vsyncpa [#allocation3], 1
    %487 = vsyncpa [#allocation6], 1
    %488 = vsyncpa [#allocation4], 1

</llo_original>
